<compile_context>
chip_gen: v6e
topology: v6e:2x2x1
jax: 0.10.0
libtpu: 0.0.40
codegen_flags: <defaults>
</compile_context>

<pallas_src>
import jax
import jax.numpy as jnp
from jax.experimental import pallas as pl
from jax.experimental.pallas import tpu as pltpu


def _round_up(x, m):
    return ((x + m - 1) // m) * m


def _apply_kron_factors(q_factors, mat):
    """(Q1 (x) Q2 (x) ... (x) Qk) @ mat via the mixed-product identity.

    mat: (prod(q_i.shape[1]), n). Never materializes the Kronecker product."""
    in_sizes = [int(q.shape[1]) for q in q_factors]
    n = mat.shape[1]
    out = mat.reshape(*in_sizes, n)
    for ax, q in enumerate(q_factors):
        out = jnp.tensordot(q, out, axes=([1], [ax]))   # contracted axis -> front
        out = jnp.moveaxis(out, 0, ax)                  # restore axis position
    return out.reshape(-1, n)


def _soda_svd_matmul_kernel(x_ref, w_ref, out_ref):
    # One MXU GEMM per (row-tile, col-tile); weights fully composed in the wrapper.
    out_ref[...] = jnp.dot(
        x_ref[...], w_ref[...], preferred_element_type=jnp.float32
    ).astype(out_ref.dtype)


def _pick_tiles(m, k, n_pad, tm_req, tn_req, itemsize, budget_bytes):
    """Pick (tm, tn): tm multiple of 8, tn multiple of 128 dividing n_pad, such that
    the double-buffered x / W / out tiles fit the VMEM budget."""
    tm = _round_up(min(int(tm_req), _round_up(m, 8)), 8)

    if tn_req is not None:
        tn = int(tn_req)
        assert tn % 128 == 0 and n_pad % tn == 0, "tn must be a 128-multiple dividing n_pad"
    else:
        nb_total = n_pad // 128
        tn = 128
        for nb in range(nb_total, 0, -1):
            if nb_total % nb:
                continue
            cand = nb * 128
            if 2 * itemsize * (tm * k + k * cand + tm * cand) <= budget_bytes:
                tn = cand
                break

    # If even tn=128 is too big (very large k), shrink the row tile.
    while tm > 8 and 2 * itemsize * (tm * k + k * tn + tm * tn) > budget_bytes:
        tm = _round_up(max(8, tm // 2), 8)
    return tm, tn


def injected_soda_svd_forward(
    x, U, S, Vh, delta, Q1, Q2, Q3, *,
    scale=1.0, tm=256, tn=None, compute_dtype=None,
    vmem_budget_bytes=28 * 1024 * 1024,
):
    """x: (batch, seq, in_features) -> (batch, seq, out_features)."""
    b, t, d_in = x.shape
    d_out, r = U.shape
    assert Vh.shape == (r, d_in)
    # In the module, S + delta requires len(delta) == r (true when out <= in).
    assert delta.shape[0] == r, "delta must match the SVD rank r = min(out, in)"

    f32 = jnp.float32
    # ---- grid-invariant weight composition: done once in plain JAX ---------------
    s_eff = jnp.maximum(S.astype(f32) + delta.astype(f32), 0.0)          # (r,)
    W = (U.astype(f32) * s_eff[None, :]) @ Vh.astype(f32)                # (out, in)
    W_t = _apply_kron_factors(
        [Q1.astype(f32), Q2.astype(f32), Q3.astype(f32)], W.T
    )                                                                    # (in, out)
    W_t = W_t * f32(scale)                                               # fold scale

    # ---- lane-dense output columns -----------------------------------------------
    n_pad = _round_up(d_out, 128)
    if n_pad != d_out:
        W_t = jnp.pad(W_t, ((0, 0), (0, n_pad - d_out)))

    # ---- row flattening / tiling --------------------------------------------------
    x2 = x.reshape(b * t, d_in)
    m = x2.shape[0]

    dt = x.dtype if compute_dtype is None else compute_dtype
    itemsize = max(jnp.dtype(dt).itemsize, jnp.dtype(x.dtype).itemsize)
    tm_eff, tn_eff = _pick_tiles(m, d_in, n_pad, tm, tn, itemsize, vmem_budget_bytes)

    m_pad = _round_up(m, tm_eff)
    if m_pad != m:
        x2 = jnp.pad(x2, ((0, m_pad - m), (0, 0)))

    # Optional bf16 streaming (v6e/v7x MXU peak); accumulation stays f32 in-kernel.
    x2 = x2.astype(dt)
    W_t = W_t.astype(dt)

    # Weight-column tiles on the OUTER grid axis -> each W_t tile DMA'd once and
    # reused across all row tiles (index map constant over the inner axis).
    grid = (n_pad // tn_eff, m_pad // tm_eff)

    out2 = pl.pallas_call(
        _soda_svd_matmul_kernel,
        out_shape=jax.ShapeDtypeStruct((m_pad, n_pad), x.dtype),
        grid_spec=pltpu.PrefetchScalarGridSpec(
            num_scalar_prefetch=0,
            grid=grid,
            in_specs=[
                pl.BlockSpec((tm_eff, d_in), lambda j, i: (i, 0)),   # x row tile
                pl.BlockSpec((d_in, tn_eff), lambda j, i: (0, j)),   # W_t col tile
            ],
            out_specs=pl.BlockSpec((tm_eff, tn_eff), lambda j, i: (i, j)),
        ),
        compiler_params=pltpu.CompilerParams(
            dimension_semantics=("parallel", "parallel"),   # independent output tiles
            vmem_limit_bytes=48 * 1024 * 1024,
        ),
        cost_estimate=pl.CostEstimate(
            flops=2 * m_pad * d_in * n_pad,
            transcendentals=0,
            bytes_accessed=(m_pad * d_in + d_in * n_pad + m_pad * n_pad)
            * jnp.dtype(dt).itemsize,
        ),
    )(x2, W_t)

    # TODO(synk): training-mode dropout (p > 0) not implemented; module default
    #             p = 0.0 / eval mode is an identity, which this matches exactly.
    return out2[:m, :d_out].reshape(b, t, d_out)


def _reference_forward(x2, U, S, Vh, delta, Q1, Q2, Q3, scale):
    s = jnp.maximum(S + delta, 0.0)
    W = (U * s[None, :]) @ Vh
    O = jnp.kron(jnp.kron(Q1, Q2), Q3)
    W_t = O @ W.T
    return (x2 @ W_t) * scale


if __name__ == "__main__":
    def run_case(key, batch, seq, d_in, d_out, kron_sizes, scale, tm, tn, tol):
        k_x, k_w, k_q1, k_q2, k_q3 = jax.random.split(key, 5)
        x = jax.random.normal(k_x, (batch, seq, d_in), dtype=jnp.float32)

        # Deterministic parameter setup mirroring __init__ + SVD_decompose:
        # nn.Linear(in, out, bias=False) weight, then SVD (plain-JAX glue).
        W0 = jax.random.normal(k_w, (d_out, d_in), dtype=jnp.float32) / jnp.sqrt(d_in)
        U, S, Vh = jnp.linalg.svd(W0, full_matrices=False)  # U:(out,r) S:(r,) Vh:(r,in)
        delta = jnp.full((d_out,), 0.001, dtype=jnp.float32)  # init.constant_(0.001)

        # Non-identity Kronecker factors (as after training / merge_kron).
        s1, s2, s3 = kron_sizes
        Q1 = jax.random.normal(k_q1, (s1, s1), dtype=jnp.float32)
        Q2 = jax.random.normal(k_q2, (s2, s2), dtype=jnp.float32)
        Q3 = jax.random.normal(k_q3, (s3, s3), dtype=jnp.float32)

        out = injected_soda_svd_forward(
            x, U, S, Vh, delta, Q1, Q2, Q3, scale=scale, tm=tm, tn=tn
        )
        out = jax.block_until_ready(out)

        ref = _reference_forward(
            x.reshape(-1, d_in), U, S, Vh, delta, Q1, Q2, Q3, scale
        ).reshape(batch, seq, d_out)

        assert out.shape == (batch, seq, d_out)
        assert jnp.allclose(out, ref, atol=tol, rtol=tol), "mismatch vs reference"

    key = jax.random.PRNGKey(0)
    k1, k2 = jax.random.split(key)

    # Small case matching module defaults: in_features = 32 = 2*4*4, out_features = 16.
    run_case(k1, batch=2, seq=8, d_in=32, d_out=16,
             kron_sizes=(2, 4, 4), scale=0.5, tm=256, tn=None, tol=1e-4)
    # Multi-tile case exercising the 2-D (N-tiles, M-tiles) grid:
    # in_features = 256 = 4*8*8, out_features = 160 (padded to 256 -> 2 col tiles).
    run_case(k2, batch=2, seq=24, d_in=256, d_out=160,
             kron_sizes=(4, 8, 8), scale=0.5, tm=16, tn=128, tol=2e-3)

    print("KERNEL_OK")
</pallas_src>

<mosaic_0001>
module attributes {stable_mosaic.version = 11 : i64} {
  func.func @_soda_svd_matmul_kernel(%arg0: i32, %arg1: i32, %arg2: memref<16x32xf32, #tpu.memory_space<vmem>>, %arg3: memref<32x128xf32, #tpu.memory_space<vmem>>, %arg4: memref<16x128xf32, #tpu.memory_space<vmem>>) attributes {dimension_semantics = [#tpu.dimension_semantics<parallel>, #tpu.dimension_semantics<parallel>], iteration_bounds = array<i64: 1, 1>, scalar_prefetch = 0 : i64, scratch_operands = 0 : i64, tpu.core_type = #tpu.core_type<tc>, window_params = [{transform_indices = @transform_0, window_bounds = array<i64: 16, 32>}, {transform_indices = @transform_1, window_bounds = array<i64: 32, 128>}, {transform_indices = @transform_2, window_bounds = array<i64: 16, 128>}]} {
    %c0 = arith.constant 0 : index
    %c0_0 = arith.constant 0 : index
    %0 = vector.load %arg2[%c0, %c0_0] : memref<16x32xf32, #tpu.memory_space<vmem>>, vector<16x32xf32>
    %c0_1 = arith.constant 0 : index
    %c0_2 = arith.constant 0 : index
    %1 = vector.load %arg3[%c0_1, %c0_2] : memref<32x128xf32, #tpu.memory_space<vmem>>, vector<32x128xf32>
    %cst = arith.constant dense<0.000000e+00> : vector<16x128xf32>
    %2 = tpu.matmul %0, %1, %cst {dimension_numbers = #tpu.dot_dimension_numbers<[1], [0], [0], [1], [0, 0, 1, 1], [], []>} : vector<16x32xf32>, vector<32x128xf32>, vector<16x128xf32> -> vector<16x128xf32>
    %c0_3 = arith.constant 0 : index
    %c0_4 = arith.constant 0 : index
    %3 = vector.load %arg4[%c0_3, %c0_4] : memref<16x128xf32, #tpu.memory_space<vmem>>, vector<16x128xf32>
    tpu.vector_store %arg4[%c0_3, %c0_4], %2 {strides = array<i32>} : memref<16x128xf32, #tpu.memory_space<vmem>>, vector<16x128xf32>,
    return
  }
  func.func @transform_0(%arg0: i32, %arg1: i32) -> (i32, i32) {
    %c0_i32 = arith.constant 0 : i32
    %c0_i32_0 = arith.constant 0 : i32
    return %arg1, %c0_i32 : i32, i32
  }
  func.func @transform_1(%arg0: i32, %arg1: i32) -> (i32, i32) {
    %c0_i32 = arith.constant 0 : i32
    %c0_i32_0 = arith.constant 0 : i32
    return %c0_i32, %arg0 : i32, i32
  }
  func.func @transform_2(%arg0: i32, %arg1: i32) -> (i32, i32) {
    %c0_i32 = arith.constant 0 : i32
    return %arg1, %arg0 : i32, i32
  }
}

</mosaic_0001>

<llo_original>
// kernel: tpu_custom_call.1
$region0: #{tpu_custom_call.1}
  #allocation0 [shape = 'u32[]', space=smem, size = 0x4, offset = 0x4, fixed_abs, tag = 'smem constant byte address 0x4 - core index']
  #allocation1 [shape = 'u32[144,128]{1,0:T(1,128)}', space=vmem, size = 0x12000, scoped, tag = 'internal scratch']
  %s0 = inlined_call_operand.hbm [shape: f32[16,32], index: 0, kind: input, shape index: {}]
  %s1 = inlined_call_operand.hbm [shape: f32[32,128], index: 1, kind: input, shape index: {}]
  %s2 = inlined_call_operand.hbm [shape: f32[16,128], index: 2, kind: output, shape index: {}]
  %s3 = sld [smem:[#allocation0]]
  $region26: #{tpu_custom_call.1} parent=0
    _
  %s5 = ssub.s32 1, %s3
  %s6 = scalar_select 0, %s5, %s3
  $region1: #{tpu_custom_call.1} parent=0
    #allocation2 [shape = 'u8[8192]{0}', space=vmem, size = 0x2000, scoped, tag = 'input window, operand 0, single buffered']
    #allocation3 [shape = 's32[1]{0}', space=sflag, size = 0x4, scoped, tag = 'scoped memory for tpu_custom_call.1']
    #allocation4 [shape = 's32[1]{0}', space=sflag, size = 0x4, scoped, tag = 'scoped memory for tpu_custom_call.1']
    #allocation5 [shape = 'u8[16384]{0}', space=vmem, size = 0x4000, scoped, tag = 'input window, operand 1, single buffered']
    #allocation6 [shape = 's32[1]{0}', space=sflag, size = 0x4, scoped, tag = 'scoped memory for tpu_custom_call.1']
    #allocation7 [shape = 'u8[8192]{0}', space=vmem, size = 0x2000, scoped, tag = 'output window, operand 0, single buffered']
    %7 = vsyncpa [#allocation3], 0
    %8 = vsyncpa [#allocation6], 0
    %9 = vsyncpa [#allocation4], 0
    // Predicated region
    $region2: #{tpu_custom_call.1} parent=1 // pred_check
      _
    $region3: #{tpu_custom_call.1} parent=1 // pred_check_branch
      %11 = sbr.rel (0) target = $region5
    $region4: #{tpu_custom_call.1} parent=1 // pred_region
      %s13 = ssub.s32 256, 256
      %14 = vsyncadd [#allocation3], %s13
      %s15 = sshll.u32 [#allocation2], 4
      %s16 = int_to_ptr.vmem [resolvable:$true] %s15
      %21 = dma.hbm_to_vmem [thread:$0]  %s0, 256, %s16, [#allocation3], 128, 128, 8
    $region5: #{tpu_custom_call.1} parent=1 // pred_fallthru
      _
    // Predicated region
    $region6: #{tpu_custom_call.1} parent=1 // pred_check
      _
    $region7: #{tpu_custom_call.1} parent=1 // pred_check_branch
      %23 = sbr.rel (0) target = $region9
    $region8: #{tpu_custom_call.1} parent=1 // pred_region
      %s25 = ssub.s32 512, 512
      %26 = vsyncadd [#allocation6], %s25
      %s27 = sshll.u32 [#allocation5], 4
      %s28 = int_to_ptr.vmem [resolvable:$true] %s27
      %33 = dma.hbm_to_vmem [thread:$0]  %s1, 512, %s28, [#allocation6], 128, 128, 8
    $region9: #{tpu_custom_call.1} parent=1 // pred_fallthru
      _
    // Predicated region
    $region10: #{tpu_custom_call.1} parent=1 // pred_check
      _
    $region11: #{tpu_custom_call.1} parent=1 // pred_check_branch
      %35 = sbr.rel (0) target = $region13
    $region12: #{tpu_custom_call.1} parent=1 // pred_region
      %36 = dma.done [#allocation3], 256
    $region13: #{tpu_custom_call.1} parent=1 // pred_fallthru
      _
    // Predicated region
    $region14: #{tpu_custom_call.1} parent=1 // pred_check
      _
    $region15: #{tpu_custom_call.1} parent=1 // pred_check_branch
      %38 = sbr.rel (0) target = $region17
    $region16: #{tpu_custom_call.1} parent=1 // pred_region
      %39 = dma.done [#allocation6], 512
    $region17: #{tpu_custom_call.1} parent=1 // pred_fallthru
      _
    %v40 = vld [vmem:[#allocation2] sm:$0xff]
    %v41 = vld [vmem:[#allocation2 + $0x8] sm:$0xff]
    %v42 = vld [vmem:[#allocation5] sm:$0xff]
    %v43 = vld [vmem:[#allocation5 + $0x8] sm:$0xff]
    %v44 = vld [vmem:[#allocation5 + $0x10] sm:$0xff]
    %v45 = vld [vmem:[#allocation5 + $0x18] sm:$0xff]
    %vm46 = vcmask 261120
    %v48 = vsel %vm46, %v40, 0
    %v51 = vsel %vm46, %v41, 0
    %53 = vmatprep.subr.mxu0 0.0
    %54 = vmatpush1.msra.mxu0 0.0
    %55 = vmatprep.subr.mxu0 0.0
    %56 = vmatpush1.msra.mxu0 0.0
    %57 = vmatprep.subr.mxu0 0.0
    %58 = vmatpush1.msra.mxu0 0.0
    %59 = vmatprep.subr.mxu0 0.0
    %60 = vmatpush1.msra.mxu0 0.0
    %61 = vmatprep.subr.mxu0 0.0
    %62 = vmatpush1.msra.mxu0 0.0
    %63 = vmatprep.subr.mxu0 0.0
    %64 = vmatpush1.msra.mxu0 0.0
    %65 = vmatprep.subr.mxu0 0.0
    %66 = vmatpush1.msra.mxu0 0.0
    %67 = vmatprep.subr.mxu0 0.0
    %68 = vmatpush1.msra.mxu0 0.0
    %69 = vmatprep.subr.mxu0 0.0
    %70 = vmatpush1.msra.mxu0 0.0
    %71 = vmatprep.subr.mxu0 0.0
    %72 = vmatpush1.msra.mxu0 0.0
    %73 = vmatprep.subr.mxu0 0.0
    %74 = vmatpush1.msra.mxu0 0.0
    %75 = vmatprep.subr.mxu0 0.0
    %76 = vmatpush1.msra.mxu0 0.0
    %77 = vmatprep.subr.mxu0 0.0
    %78 = vmatpush1.msra.mxu0 %v45
    %79 = vmatprep.subr.mxu0 0.0
    %80 = vmatpush1.msra.mxu0 %v44
    %81 = vmatprep.subr.mxu0 0.0
    %82 = vmatpush1.msra.mxu0 %v43
    %83 = vmatprep.subr.mxu0 0.0
    %84 = vmatpush1.msra.mxu0 %v42
    %85 = vmatprep.subr.mxu0 0.0
    %86 = vmatpush2.msra.mxu0 0.0
    %87 = vmatprep.subr.mxu0 0.0
    %88 = vmatpush2.msra.mxu0 0.0
    %89 = vmatprep.subr.mxu0 0.0
    %90 = vmatpush2.msra.mxu0 0.0
    %91 = vmatprep.subr.mxu0 0.0
    %92 = vmatpush2.msra.mxu0 0.0
    %93 = vmatprep.subr.mxu0 0.0
    %94 = vmatpush2.msra.mxu0 0.0
    %95 = vmatprep.subr.mxu0 0.0
    %96 = vmatpush2.msra.mxu0 0.0
    %97 = vmatprep.subr.mxu0 0.0
    %98 = vmatpush2.msra.mxu0 0.0
    %99 = vmatprep.subr.mxu0 0.0
    %100 = vmatpush2.msra.mxu0 0.0
    %101 = vmatprep.subr.mxu0 0.0
    %102 = vmatpush2.msra.mxu0 0.0
    %103 = vmatprep.subr.mxu0 0.0
    %104 = vmatpush2.msra.mxu0 0.0
    %105 = vmatprep.subr.mxu0 0.0
    %106 = vmatpush2.msra.mxu0 0.0
    %107 = vmatprep.subr.mxu0 0.0
    %108 = vmatpush2.msra.mxu0 0.0
    %109 = vmatprep.subr.mxu0 0.0
    %110 = vmatpush2.msra.mxu0 0.0
    %111 = vmatprep.subr.mxu0 0.0
    %112 = vmatpush2.msra.mxu0 0.0
    %113 = vmatprep.subr.mxu0 0.0
    %114 = vmatpush2.msra.mxu0 0.0
    %115 = vmatprep.subr.mxu0 0.0
    %116 = vmatpush2.msra.mxu0 0.0
    %117 = vmatprep.mubr.f32.mxu0 0.0
    %118 = vmatmul.mubr.f32.gmra.mxu0 %v48
    %v119 = vpop.f32.mrf.mxu0
    %v120 = vadd.f32 0.0, %v119
    %v121 = vpop.f32.mrf.mxu0
    %122 = vmatprep.mubr.f32.mxu0 0.0
    %123 = vmatmul.mubr.f32.gmra.mxu0 %v51
    %v124 = vpop.f32.mrf.mxu0
    %v125 = vadd.f32 0.0, %v124
    %v126 = vpop.f32.mrf.mxu0
    %127 = vdwg.mxu0
    %128 = vst [vmem:[#allocation7] sm:$0xff] %v120
    %129 = vst [vmem:[#allocation7 + $0x8] sm:$0xff] %v125
    // Predicated region
    $region18: #{tpu_custom_call.1} parent=1 // pred_check
      _
    $region19: #{tpu_custom_call.1} parent=1 // pred_check_branch
      %131 = sbr.rel (0) target = $region21
    $region20: #{tpu_custom_call.1} parent=1 // pred_region
      %s133 = ssub.s32 256, 256
      %134 = vsyncadd [#allocation4], %s133
      %s135 = sshll.u32 [#allocation7], 4
      %s136 = int_to_ptr.vmem [resolvable:$true] %s135
      %141 = dma.vmem_to_hbm [thread:$0]  %s136, 256, %s2, [#allocation4], 128, 128, 8
    $region21: #{tpu_custom_call.1} parent=1 // pred_fallthru
      _
    // Predicated region
    $region22: #{tpu_custom_call.1} parent=1 // pred_check
      _
    $region23: #{tpu_custom_call.1} parent=1 // pred_check_branch
      %143 = sbr.rel (0) target = $region25
    $region24: #{tpu_custom_call.1} parent=1 // pred_region
      %144 = dma.done [#allocation4], 256
    $region25: #{tpu_custom_call.1} parent=1 // pred_fallthru
      _
    %145 = vsyncpa [#allocation3], 1
    %146 = vsyncpa [#allocation6], 1
    %147 = vsyncpa [#allocation4], 1

</llo_original>
